<compile_context>
chip_gen: v6e
topology: v6e:2x2x1
jax: 0.10.0
libtpu: 0.0.40
codegen_flags: <defaults>
</compile_context>

<pallas_src>
import functools

import jax
import jax.numpy as jnp
from jax.experimental import pallas as pl
from jax.experimental.pallas import tpu as pltpu


_LANE_MAX = 2048                       # lane-dense last-dim target (multiple of 128)
_TILE_BYTES_DEFAULT = 2 * 1024 * 1024  # per-buffer tile: v5e / v6e
_TILE_BYTES_V7 = 4 * 1024 * 1024       # per-buffer tile: v7x (64 MiB VMEM, 3.2 TB/s HBM)


def _round_up(a, b):
    return (a + b - 1) // b * b


def _device_kind():
    try:
        return jax.devices()[0].device_kind.lower()
    except Exception:
        return ""


def _rezero_kernel(fn, compute_dtype, g_ref, x_ref, o_ref):
    # g lives in SMEM; read once per grid step. No g==0 fast path: the pipeline
    # DMAs every x tile regardless, and DMA is the entire cost here.
    g = g_ref[0].astype(compute_dtype)
    y = fn(x_ref[...].astype(compute_dtype)) * g
    o_ref[...] = y.astype(o_ref.dtype)


def rezero(x, g, fn=lambda v: v, *, donate=False):
    """out = fn(x) * g (Rezero), fused in a single tiled Pallas pass.

    x      : arbitrary-shape array (NCHW in the diffusers module)
    g      : (1,) learnable gate (initialized to zeros in the module)
    fn     : elementwise JAX callable (the wrapped sub-module's forward)
             # TODO(synk): a non-elementwise fn (e.g. LinearAttention) is NOT
             # valid under the flatten/reshape used here and needs its own kernel.
    donate : set True (and donate x at the jit boundary) to alias the output
             onto x's buffer and avoid a second activation-sized HBM allocation.
    """
    orig_shape = x.shape
    total = int(x.size)
    if total == 0:
        return x
    bytes_per = jnp.dtype(x.dtype).itemsize
    kind = _device_kind()
    is_v7 = ("v7" in kind) or ("7x" in kind)

    # -------- per-generation knobs --------------------------------------
    tile_bytes = _TILE_BYTES_V7 if is_v7 else _TILE_BYTES_DEFAULT
    if x.dtype == jnp.bfloat16 and (("v6" in kind) or is_v7):
        compute_dtype = jnp.bfloat16      # v6e/v7x have bf16 VPU/EUP: halve vreg traffic
    else:
        compute_dtype = jnp.float32       # v5e (and default): f32 math path
    # NOTE: integer inputs round-trip through f32 and truncate on the final cast.

    # -------- lane-dense 2-D layout: prefer a lane that divides total ----
    if total % 128 == 0:
        lane = 128
        for cand in range(min(_LANE_MAX, total), 127, -128):
            if total % cand == 0:
                lane = cand
                break
        padded_total = total              # no pad / slice pass
    else:
        # Ragged size: rare fallback, pays one pad + one slice pass.
        # TODO(synk): mask the final tile's store in-kernel to drop this pad pass.
        lane = min(_LANE_MAX, _round_up(total, 128))
        padded_total = _round_up(total, lane)
    rows = padded_total // lane

    # -------- sublane tile: ~tile_bytes per buffer, packed-dtype aligned --
    sub_align = max(8, 32 // bytes_per)   # (8,128) rule; 16 for bf16, 32 for int8
    tm = max(sub_align, (tile_bytes // (lane * bytes_per)) // sub_align * sub_align)
    if rows >= 2 * sub_align:
        # Guarantee >= 2 grid steps so ("parallel",) can shard across v7x's 2 TCs.
        tm = min(tm, _round_up(pl.cdiv(rows, 2), sub_align))
    tm = min(tm, rows)                    # full-extent block is always legal
    grid = (pl.cdiv(rows, tm),)

    xf = x.reshape(-1)
    if padded_total != total:
        xf = jnp.pad(xf, (0, padded_total - total))
    x2 = xf.reshape(rows, lane)
    g32 = jnp.asarray(g, jnp.float32).reshape(1)

    aliases = {1: 0} if (donate and padded_total == total) else {}

    out2 = pl.pallas_call(
        functools.partial(_rezero_kernel, fn, compute_dtype),
        out_shape=jax.ShapeDtypeStruct((rows, lane), x.dtype),
        grid=grid,
        in_specs=[
            pl.BlockSpec(memory_space=pltpu.MemorySpace.SMEM),   # g scalar (whole array)
            pl.BlockSpec((tm, lane), lambda i: (i, 0)),          # row tile of x
        ],
        out_specs=pl.BlockSpec((tm, lane), lambda i: (i, 0)),
        input_output_aliases=aliases,
        compiler_params=pltpu.CompilerParams(
            dimension_semantics=("parallel",),     # shard row tiles across TCs (v7x)
            vmem_limit_bytes=32 * 1024 * 1024,     # headroom; 4 buffers fit easily
        ),
    )(g32, x2)

    out = out2.reshape(-1)
    if padded_total != total:
        out = out[:total]
    return out.reshape(orig_shape)


if __name__ == "__main__":
    key = jax.random.PRNGKey(0)
    fn = jnp.tanh  # example elementwise wrapped function

    # Shape consistent with the module's UNet usage (NCHW). 2*4*16*16 = 2048,
    # divisible by 128 -> no-pad path, lane=2048.
    x = jax.random.normal(key, (2, 4, 16, 16), dtype=jnp.float32)

    # Module default init: g = zeros(1) -> output must be all zeros.
    g_zero = jnp.zeros((1,), dtype=jnp.float32)
    out0 = jax.block_until_ready(rezero(x, g_zero, fn))
    assert jnp.allclose(out0, jnp.zeros_like(x), atol=1e-6), "mismatch at g=0"

    # Non-trivial gate.
    g_half = jnp.full((1,), 0.5, dtype=jnp.float32)
    out1 = jax.block_until_ready(rezero(x, g_half, fn))
    assert jnp.allclose(out1, jnp.tanh(x) * 0.5, atol=1e-5), "mismatch at g=0.5"

    # Larger activation: multi-step pipelined grid (>=2 tiles -> both v7x TCs busy).
    xl = jax.random.normal(jax.random.PRNGKey(0), (16, 64, 32, 32), dtype=jnp.float32)
    out2 = jax.block_until_ready(rezero(xl, g_half, fn))
    assert jnp.allclose(out2, jnp.tanh(xl) * 0.5, atol=1e-5), "mismatch on large input"

    # Donated / aliased path under jit (output reuses the activation buffer).
    x_d = jnp.array(xl)  # fresh copy so donation doesn't invalidate xl
    rez_d = jax.jit(lambda a, b: rezero(a, b, fn, donate=True), donate_argnums=(0,))
    out3 = jax.block_until_ready(rez_d(x_d, g_half))
    assert jnp.allclose(out3, jnp.tanh(xl) * 0.5, atol=1e-5), "mismatch on donated path"

    # Odd shape + bf16: exercises the rare pad fallback and the dtype-safe store.
    xb = jax.random.normal(jax.random.PRNGKey(0), (2, 3, 5, 7), dtype=jnp.bfloat16)
    out4 = jax.block_until_ready(rezero(xb, g_half, fn))
    ref4 = (jnp.tanh(xb.astype(jnp.float32)) * 0.5).astype(jnp.bfloat16)
    assert jnp.allclose(out4.astype(jnp.float32), ref4.astype(jnp.float32),
                        atol=2e-2), "mismatch on bf16 / padded input"

    print("KERNEL_OK")
</pallas_src>

<mosaic_0001>
module attributes {stable_mosaic.version = 11 : i64} {
  func.func @_rezero_kernel(%arg0: i32, %arg1: memref<1xf32, #tpu.memory_space<smem>>, %arg2: memref<1x2048xf32, #tpu.memory_space<vmem>>, %arg3: memref<1x2048xf32, #tpu.memory_space<vmem>>) attributes {dimension_semantics = [#tpu.dimension_semantics<parallel>], iteration_bounds = array<i64: 1>, scalar_prefetch = 0 : i64, scratch_operands = 0 : i64, tpu.core_type = #tpu.core_type<tc>, window_params = [{transform_indices = @transform_0, window_bounds = array<i64: 1>}, {transform_indices = @transform_1, window_bounds = array<i64: 1, 2048>}, {transform_indices = @transform_2, window_bounds = array<i64: 1, 2048>}]} {
    %c0 = arith.constant 0 : index
    %0 = memref.load %arg1[%c0] : memref<1xf32, #tpu.memory_space<smem>>
    %c0_0 = arith.constant 0 : index
    %c0_1 = arith.constant 0 : index
    %1 = vector.load %arg2[%c0_0, %c0_1] : memref<1x2048xf32, #tpu.memory_space<vmem>>, vector<1x2048xf32>
    %2 = math.tanh %1 : vector<1x2048xf32>
    %3 = vector.broadcast %0 : f32 to vector<1x2048xf32>
    %4 = arith.mulf %2, %3 : vector<1x2048xf32>
    %c0_2 = arith.constant 0 : index
    %c0_3 = arith.constant 0 : index
    %5 = vector.load %arg3[%c0_2, %c0_3] : memref<1x2048xf32, #tpu.memory_space<vmem>>, vector<1x2048xf32>
    tpu.vector_store %arg3[%c0_2, %c0_3], %4 {strides = array<i32>} : memref<1x2048xf32, #tpu.memory_space<vmem>>, vector<1x2048xf32>,
    return
  }
  func.func @transform_0(%arg0: i32) -> i32 {
    %c0_i32 = arith.constant 0 : i32
    %c0_i32_0 = arith.constant 0 : i32
    return %c0_i32 : i32
  }
  func.func @transform_1(%arg0: i32) -> (i32, i32) {
    %c0_i32 = arith.constant 0 : i32
    %c0_i32_0 = arith.constant 0 : i32
    return %arg0, %c0_i32 : i32, i32
  }
  func.func @transform_2(%arg0: i32) -> (i32, i32) {
    %c0_i32 = arith.constant 0 : i32
    %c0_i32_0 = arith.constant 0 : i32
    return %arg0, %c0_i32 : i32, i32
  }
}

</mosaic_0001>

<llo_original>
// kernel: tpu_custom_call.1
$region0: #{tpu_custom_call.1}
  #allocation0 [shape = 'u32[]', space=smem, size = 0x4, offset = 0x4, fixed_abs, tag = 'smem constant byte address 0x4 - core index']
  #allocation1 [shape = 'u32[144,128]{1,0:T(1,128)}', space=vmem, size = 0x12000, scoped, tag = 'internal scratch']
  #allocation2 [shape = 'f32[1]{0:T(128)S(6)}', space=smem, size = 0x200, scoped, tag = 'scoped memory for tpu_custom_call.1']
  %s0 = inlined_call_operand.<no memory space> [shape: f32[1], index: 0, kind: input, shape index: {}]
  %s1 = inlined_call_operand.hbm [shape: f32[1,2048], index: 1, kind: input, shape index: {}]
  %s2 = inlined_call_operand.hbm [shape: f32[1,2048], index: 2, kind: output, shape index: {}]
  %s3 = sld [smem:[#allocation0]]
  $region22: #{tpu_custom_call.1} parent=0
    _
  %s5 = ssub.s32 1, %s3
  %s6 = scalar_select 0, %s5, %s3
  %7 = sst [smem:[#allocation2]] %s0
  $region1: #{tpu_custom_call.1} parent=0
    #allocation3 [shape = 'u8[8192]{0}', space=vmem, size = 0x2000, scoped, tag = 'input window, operand 1, single buffered']
    #allocation4 [shape = 's32[1]{0}', space=sflag, size = 0x4, scoped, tag = 'scoped memory for tpu_custom_call.1']
    #allocation5 [shape = 's32[1]{0}', space=sflag, size = 0x4, scoped, tag = 'scoped memory for tpu_custom_call.1']
    #allocation6 [shape = 'u8[8192]{0}', space=vmem, size = 0x2000, scoped, tag = 'output window, operand 0, single buffered']
    %8 = vsyncpa [#allocation4], 0
    %9 = vsyncpa [#allocation5], 0
    // Predicated region
    $region2: #{tpu_custom_call.1} parent=1 // pred_check
      _
    $region3: #{tpu_custom_call.1} parent=1 // pred_check_branch
      %11 = sbr.rel (0) target = $region5
    $region4: #{tpu_custom_call.1} parent=1 // pred_region
      _
    $region5: #{tpu_custom_call.1} parent=1 // pred_fallthru
      _
    // Predicated region
    $region6: #{tpu_custom_call.1} parent=1 // pred_check
      _
    $region7: #{tpu_custom_call.1} parent=1 // pred_check_branch
      %13 = sbr.rel (0) target = $region9
    $region8: #{tpu_custom_call.1} parent=1 // pred_region
      %s15 = ssub.s32 256, 256
      %16 = vsyncadd [#allocation4], %s15
      %s18 = sshll.u32 [#allocation3], 4
      %s19 = int_to_ptr.vmem [resolvable:$true] %s18
      %21 = dma.hbm_to_vmem [thread:$0]  %s1, 256, %s19, [#allocation4]
    $region9: #{tpu_custom_call.1} parent=1 // pred_fallthru
      _
    // Predicated region
    $region10: #{tpu_custom_call.1} parent=1 // pred_check
      _
    $region11: #{tpu_custom_call.1} parent=1 // pred_check_branch
      %23 = sbr.rel (0) target = $region13
    $region12: #{tpu_custom_call.1} parent=1 // pred_region
      %24 = dma.done [#allocation4], 256
    $region13: #{tpu_custom_call.1} parent=1 // pred_fallthru
      _
    %s25 = sld [smem:[#allocation2]]
    %v26 = vld [vmem:[#allocation3] sm:$0xff]
    %v27 = vld [vmem:[#allocation3 + $0x8] sm:$0xff]
    %v28 = vtanh.pop %v26
    %v29 = vtanh.pop %v27
    %v30 = vstv %s25
    %v31 = vmul.f32 %v28, %v30
    %v32 = vmul.f32 %v29, %v30
    %33 = vst [vmem:[#allocation6] sm:$0xff] %v31
    %34 = vst [vmem:[#allocation6 + $0x8] sm:$0xff] %v32
    // Predicated region
    $region14: #{tpu_custom_call.1} parent=1 // pred_check
      _
    $region15: #{tpu_custom_call.1} parent=1 // pred_check_branch
      %36 = sbr.rel (0) target = $region17
    $region16: #{tpu_custom_call.1} parent=1 // pred_region
      %s38 = ssub.s32 256, 256
      %39 = vsyncadd [#allocation5], %s38
      %s41 = sshll.u32 [#allocation6], 4
      %s42 = int_to_ptr.vmem [resolvable:$true] %s41
      %44 = dma.vmem_to_hbm [thread:$0]  %s42, 256, %s2, [#allocation5]
    $region17: #{tpu_custom_call.1} parent=1 // pred_fallthru
      _
    // Predicated region
    $region18: #{tpu_custom_call.1} parent=1 // pred_check
      _
    $region19: #{tpu_custom_call.1} parent=1 // pred_check_branch
      %46 = sbr.rel (0) target = $region21
    $region20: #{tpu_custom_call.1} parent=1 // pred_region
      %47 = dma.done [#allocation5], 256
    $region21: #{tpu_custom_call.1} parent=1 // pred_fallthru
      _
    %48 = vsyncpa [#allocation4], 1
    %49 = vsyncpa [#allocation5], 1

</llo_original>
